<compile_context>
chip_gen: v5e
topology: v5e:2x2
jax: 0.10.0
libtpu: 0.0.40
codegen_flags: <defaults>
</compile_context>

<pallas_src>
import functools

import jax
import jax.numpy as jnp
from jax.experimental import pallas as pl
from jax.experimental.pallas import tpu as pltpu


# ---------------------------------------------------------------------------
# helpers
# ---------------------------------------------------------------------------
def _round_up(x, m):
    return ((x + m - 1) // m) * m


def _pick_tile(dim, prefs=(512, 256, 128)):
    """Largest preferred tile dividing dim; fall back to the full dim."""
    for p in prefs:
        if dim % p == 0:
            return p
    return dim


# ---------------------------------------------------------------------------
# Pallas kernel: tiled matmul with f32 accumulator, fused bias + optional ReLU
#   grid = (M//tm, N//tn, K//tk)  -- reduction axis last
# ---------------------------------------------------------------------------
def _matmul_bias_act_kernel(a_ref, b_ref, bias_ref, o_ref, acc_ref, *, apply_relu):
    k = pl.program_id(2)

    @pl.when(k == 0)
    def _():
        acc_ref[...] = jnp.zeros_like(acc_ref)

    acc_ref[...] += jnp.dot(
        a_ref[...], b_ref[...], preferred_element_type=jnp.float32
    )

    @pl.when(k == pl.num_programs(2) - 1)
    def _():
        out = acc_ref[...] + bias_ref[...]
        if apply_relu:
            out = jnp.maximum(out, 0.0)
        o_ref[...] = out.astype(o_ref.dtype)


def matmul_bias_act(a, b, bias=None, *, apply_relu=False, out_dtype=jnp.float32):
    """out = act(a @ b + bias).  a:(M,K), b:(K,N), bias:(N,) or None."""
    M, K = a.shape
    Kb, N = b.shape
    assert K == Kb
    tm = _pick_tile(M)
    tk = _pick_tile(K)
    tn = _pick_tile(N, prefs=(512, 256, 128))

    if bias is None:
        bias2d = jnp.zeros((1, N), jnp.float32)
    else:
        bias2d = bias.reshape(1, N).astype(jnp.float32)

    kernel = functools.partial(_matmul_bias_act_kernel, apply_relu=apply_relu)

    flops = 2 * M * N * K
    bytes_accessed = (
        a.size * a.dtype.itemsize
        + b.size * b.dtype.itemsize
        + bias2d.size * 4
        + M * N * jnp.dtype(out_dtype).itemsize
    )

    return pl.pallas_call(
        kernel,
        out_shape=jax.ShapeDtypeStruct((M, N), out_dtype),
        grid_spec=pltpu.PrefetchScalarGridSpec(
            num_scalar_prefetch=0,
            grid=(M // tm, N // tn, K // tk),
            in_specs=[
                pl.BlockSpec((tm, tk), lambda i, j, k: (i, k)),
                pl.BlockSpec((tk, tn), lambda i, j, k: (k, j)),
                pl.BlockSpec((1, tn), lambda i, j, k: (0, j)),
            ],
            out_specs=pl.BlockSpec((tm, tn), lambda i, j, k: (i, j)),
            scratch_shapes=[pltpu.VMEM((tm, tn), jnp.float32)],
        ),
        compiler_params=pltpu.CompilerParams(
            dimension_semantics=("parallel", "parallel", "arbitrary")
        ),
        cost_estimate=pl.CostEstimate(
            flops=flops, transcendentals=0, bytes_accessed=bytes_accessed
        ),
    )(a, b, bias2d)


# ---------------------------------------------------------------------------
# Glue: normalized dense adjacency A_hat from edge_index (plain JAX, bf16 out)
# ---------------------------------------------------------------------------
def normalized_adjacency(edge_index, num_nodes):
    src = edge_index[0]
    dst = edge_index[1]
    # messages flow src -> dst; aggregation at dst => rows = targets
    a = jnp.zeros((num_nodes, num_nodes), jnp.float32).at[dst, src].add(1.0)
    # add_remaining_self_loops: only add a self loop where none exists
    diag = jnp.diagonal(a)
    a = a + jnp.diag(jnp.where(diag == 0.0, 1.0, 0.0))
    deg = a.sum(axis=1)
    dinv = jnp.where(deg > 0, jax.lax.rsqrt(deg), 0.0)
    a = dinv[:, None] * a * dinv[None, :]
    return a.astype(jnp.bfloat16)  # values in [0,1]; halves HBM traffic


# ---------------------------------------------------------------------------
# GCN module: n_layers of GCNConv, ReLU between all but the last
# ---------------------------------------------------------------------------
def _layer_dims(in_dim, hid_dim, out_dim, n_layers):
    # matches: convs[0]=GCNConv(in,hid); middle GCNConv(hid,hid); last GCNConv(hid,out)
    if n_layers == 1:
        return [in_dim, hid_dim]
    return [in_dim] + [hid_dim] * (n_layers - 1) + [out_dim]


def init_gcn_params(key, in_dim, hid_dim, out_dim, n_layers):
    dims = _layer_dims(in_dim, hid_dim, out_dim, n_layers)
    params = []
    for li in range(n_layers):
        key, wk = jax.random.split(key)
        fan_in, fan_out = dims[li], dims[li + 1]
        limit = jnp.sqrt(6.0 / (fan_in + fan_out))  # glorot uniform
        w = jax.random.uniform(wk, (fan_in, fan_out), jnp.float32, -limit, limit)
        b = jnp.zeros((fan_out,), jnp.float32)      # GCNConv bias init = zeros
        params.append((w, b))
    return params


def gcn_forward(params, x, edge_index):
    n, f_in = x.shape
    n_layers = len(params)

    # --- padding to lane/tile-friendly sizes ---
    n_pad = _round_up(max(n, 8), 512)          # node axis: multiple of 512 tiles
    f_in_pad = _round_up(f_in, 128)            # feature axes: multiples of 128

    a_hat = normalized_adjacency(edge_index, n)
    a_pad = jnp.zeros((n_pad, n_pad), jnp.bfloat16).at[:n, :n].set(a_hat)

    h = jnp.zeros((n_pad, f_in_pad), jnp.float32).at[:n, :f_in].set(x)

    for li, (w, b) in enumerate(params):
        fin, fout = w.shape
        fin_pad = _round_up(fin, 128)
        fout_pad = _round_up(fout, 128)
        assert h.shape[1] == fin_pad

        w_pad = jnp.zeros((fin_pad, fout_pad), jnp.float32).at[:fin, :fout].set(w)
        b_pad = jnp.zeros((fout_pad,), jnp.float32).at[:fout].set(b)

        relu = li < n_layers - 1

        # hoisted X @ W (once per layer), emitted in bf16 for the aggregation
        xw = matmul_bias_act(h, w_pad, None, apply_relu=False,
                             out_dtype=jnp.bfloat16)
        # A_hat @ XW + b (+ReLU), tiled over (rows, cols, reduction)
        h = matmul_bias_act(a_pad, xw, b_pad, apply_relu=relu,
                            out_dtype=jnp.float32)

    fout_last = params[-1][0].shape[1]
    return h[:n, :fout_last]


# ---------------------------------------------------------------------------
# demo / correctness check
# ---------------------------------------------------------------------------
if __name__ == "__main__":
    key = jax.random.PRNGKey(0)

    num_nodes = 16
    num_edges = 40
    in_dim, hid_dim, out_dim, n_layers = 8, 32, 16, 2

    kx, ke, kp = jax.random.split(key, 3)
    x = jax.random.normal(kx, (num_nodes, in_dim), jnp.float32)
    edge_index = jax.random.randint(ke, (2, num_edges), 0, num_nodes, jnp.int32)

    params = init_gcn_params(kp, in_dim, hid_dim, out_dim, n_layers)

    out = gcn_forward(params, x, edge_index)
    out = jax.block_until_ready(out)

    # pure-JAX reference with the same bf16 quantization of A_hat and XW
    a_f32 = normalized_adjacency(edge_index, num_nodes).astype(jnp.float32)
    ref = x
    for li, (w, b) in enumerate(params):
        xw_ref = (ref @ w).astype(jnp.bfloat16).astype(jnp.float32)
        ref = a_f32 @ xw_ref + b
        if li < n_layers - 1:
            ref = jnp.maximum(ref, 0.0)

    assert out.shape == (num_nodes, out_dim)
    assert jnp.allclose(out, ref, atol=1e-2, rtol=1e-2), (
        float(jnp.max(jnp.abs(out - ref)))
    )
    print("KERNEL_OK")
</pallas_src>

<mosaic_0001>
module attributes {stable_mosaic.version = 11 : i64} {
  func.func @_matmul_bias_act_kernel(%arg0: i32, %arg1: i32, %arg2: i32, %arg3: memref<512x128xf32, #tpu.memory_space<vmem>>, %arg4: memref<128x128xf32, #tpu.memory_space<vmem>>, %arg5: memref<1x128xf32, #tpu.memory_space<vmem>>, %arg6: memref<512x128xbf16, #tpu.memory_space<vmem>>, %arg7: memref<512x128xf32, #tpu.memory_space<vmem>>) attributes {dimension_semantics = [#tpu.dimension_semantics<parallel>, #tpu.dimension_semantics<parallel>, #tpu.dimension_semantics<arbitrary>], iteration_bounds = array<i64: 1, 1, 1>, scalar_prefetch = 0 : i64, scratch_operands = 1 : i64, tpu.core_type = #tpu.core_type<tc>, window_params = [{transform_indices = @transform_0, window_bounds = array<i64: 512, 128>}, {transform_indices = @transform_1, window_bounds = array<i64: 128, 128>}, {transform_indices = @transform_2, window_bounds = array<i64: 1, 128>}, {transform_indices = @transform_3, window_bounds = array<i64: 512, 128>}]} {
    %c0_i32 = arith.constant 0 : i32
    %0 = arith.cmpi eq, %arg2, %c0_i32 : i32
    %1 = arith.extui %0 : i1 to i32
    %c0_i32_0 = arith.constant 0 : i32
    %2 = arith.cmpi ne, %1, %c0_i32_0 : i32
    scf.if %2 {
      %cst_10 = arith.constant 0.000000e+00 : f32
      %12 = vector.broadcast %cst_10 : f32 to vector<512x128xf32>
      %c0_11 = arith.constant 0 : index
      %c0_12 = arith.constant 0 : index
      %13 = vector.load %arg7[%c0_11, %c0_12] : memref<512x128xf32, #tpu.memory_space<vmem>>, vector<512x128xf32>
      tpu.vector_store %arg7[%c0_11, %c0_12], %12 {strides = array<i32>} : memref<512x128xf32, #tpu.memory_space<vmem>>, vector<512x128xf32>,
    } else {
    }
    %c0 = arith.constant 0 : index
    %c0_1 = arith.constant 0 : index
    %3 = vector.load %arg7[%c0, %c0_1] : memref<512x128xf32, #tpu.memory_space<vmem>>, vector<512x128xf32>
    %c0_2 = arith.constant 0 : index
    %c0_3 = arith.constant 0 : index
    %4 = vector.load %arg3[%c0_2, %c0_3] : memref<512x128xf32, #tpu.memory_space<vmem>>, vector<512x128xf32>
    %c0_4 = arith.constant 0 : index
    %c0_5 = arith.constant 0 : index
    %5 = vector.load %arg4[%c0_4, %c0_5] : memref<128x128xf32, #tpu.memory_space<vmem>>, vector<128x128xf32>
    %cst = arith.constant dense<0.000000e+00> : vector<512x128xf32>
    %6 = tpu.matmul %4, %5, %cst {dimension_numbers = #tpu.dot_dimension_numbers<[1], [0], [0], [1], [0, 0, 1, 1], [], []>} : vector<512x128xf32>, vector<128x128xf32>, vector<512x128xf32> -> vector<512x128xf32>
    %7 = arith.addf %3, %6 : vector<512x128xf32>
    %c0_6 = arith.constant 0 : index
    %c0_7 = arith.constant 0 : index
    %8 = vector.load %arg7[%c0_6, %c0_7] : memref<512x128xf32, #tpu.memory_space<vmem>>, vector<512x128xf32>
    tpu.vector_store %arg7[%c0_6, %c0_7], %7 {strides = array<i32>} : memref<512x128xf32, #tpu.memory_space<vmem>>, vector<512x128xf32>,
    %c0_i32_8 = arith.constant 0 : i32
    %9 = arith.cmpi eq, %arg2, %c0_i32_8 : i32
    %10 = arith.extui %9 : i1 to i32
    %c0_i32_9 = arith.constant 0 : i32
    %11 = arith.cmpi ne, %10, %c0_i32_9 : i32
    scf.if %11 {
      %c0_10 = arith.constant 0 : index
      %c0_11 = arith.constant 0 : index
      %12 = vector.load %arg7[%c0_10, %c0_11] : memref<512x128xf32, #tpu.memory_space<vmem>>, vector<512x128xf32>
      %c0_12 = arith.constant 0 : index
      %c0_13 = arith.constant 0 : index
      %13 = vector.load %arg5[%c0_12, %c0_13] : memref<1x128xf32, #tpu.memory_space<vmem>>, vector<1x128xf32>
      %14 = vector.broadcast %13 : vector<1x128xf32> to vector<512x128xf32>
      %15 = arith.addf %12, %14 : vector<512x128xf32>
      %16 = arith.truncf %15 : vector<512x128xf32> to vector<512x128xbf16>
      %c0_14 = arith.constant 0 : index
      %c0_15 = arith.constant 0 : index
      %17 = vector.load %arg6[%c0_14, %c0_15] : memref<512x128xbf16, #tpu.memory_space<vmem>>, vector<512x128xbf16>
      tpu.vector_store %arg6[%c0_14, %c0_15], %16 {strides = array<i32>} : memref<512x128xbf16, #tpu.memory_space<vmem>>, vector<512x128xbf16>,
    } else {
    }
    return
  }
  func.func @transform_0(%arg0: i32, %arg1: i32, %arg2: i32) -> (i32, i32) {
    %c0_i32 = arith.constant 0 : i32
    return %arg0, %arg2 : i32, i32
  }
  func.func @transform_1(%arg0: i32, %arg1: i32, %arg2: i32) -> (i32, i32) {
    %c0_i32 = arith.constant 0 : i32
    return %arg2, %arg1 : i32, i32
  }
  func.func @transform_2(%arg0: i32, %arg1: i32, %arg2: i32) -> (i32, i32) {
    %c0_i32 = arith.constant 0 : i32
    %c0_i32_0 = arith.constant 0 : i32
    return %c0_i32, %arg1 : i32, i32
  }
  func.func @transform_3(%arg0: i32, %arg1: i32, %arg2: i32) -> (i32, i32) {
    %c0_i32 = arith.constant 0 : i32
    return %arg0, %arg1 : i32, i32
  }
}

</mosaic_0001>

<llo_original>
// kernel: tpu_custom_call.1
$region0: #{tpu_custom_call.1}
  #allocation0 [shape = 'u32[]', space=smem, size = 0x4, offset = 0x4, fixed_abs, tag = 'smem constant byte address 0x4 - core index']
  #allocation1 [shape = 'u32[72,128]{1,0:T(1,128)}', space=vmem, size = 0x9000, scoped, tag = 'internal scratch']
  #allocation2 [shape = 'f32[512,128]{1,0:T(8,128)}', space=vmem, size = 0x40000, scoped, tag = 'scratch operand']
  %s0 = inlined_call_operand.hbm [shape: f32[512,128], index: 0, kind: input, shape index: {}]
  %s1 = inlined_call_operand.hbm [shape: f32[128,128], index: 1, kind: input, shape index: {}]
  %s2 = inlined_call_operand.vmem [shape: f32[1,128], index: 2, kind: input, shape index: {}]
  %s3 = inlined_call_operand.hbm [shape: bf16[512,128], index: 3, kind: output, shape index: {}]
  %s4 = sld [smem:[#allocation0]]
  $region38: #{tpu_custom_call.1} parent=0
    _
  %s6 = ssub.s32 1, %s4
  %s7 = scalar_select 0, %s6, %s4
  $region1: #{tpu_custom_call.1} parent=0
    #allocation3 [shape = 'u8[262144]{0}', space=vmem, size = 0x40000, scoped, tag = 'input window, operand 0, single buffered']
    #allocation4 [shape = 's32[1]{0}', space=sflag, size = 0x4, scoped, tag = 'scoped memory for tpu_custom_call.1']
    #allocation5 [shape = 's32[1]{0}', space=sflag, size = 0x4, scoped, tag = 'scoped memory for tpu_custom_call.1']
    #allocation6 [shape = 'u8[65536]{0}', space=vmem, size = 0x10000, scoped, tag = 'input window, operand 1, single buffered']
    #allocation7 [shape = 's32[1]{0}', space=sflag, size = 0x4, scoped, tag = 'scoped memory for tpu_custom_call.1']
    #allocation8 [shape = 'u8[131072]{0}', space=vmem, size = 0x20000, scoped, tag = 'output window, operand 0, single buffered']
    %8 = vsyncpa [#allocation4], 0
    %9 = vsyncpa [#allocation7], 0
    %10 = vsyncpa [#allocation5], 0
    // Predicated region
    $region2: #{tpu_custom_call.1} parent=1 // pred_check
      _
    $region3: #{tpu_custom_call.1} parent=1 // pred_check_branch
      %12 = sbr.rel (0) target = $region5
    $region4: #{tpu_custom_call.1} parent=1 // pred_region
      %14 = vsyncadd [#allocation4], 0
      %s15 = sshll.u32 %s0, 4
      %s16 = int_to_ptr.hbm [resolvable:$true] %s15
      %s17 = sshll.u32 [#allocation3], 4
      %s18 = int_to_ptr.vmem [resolvable:$true] %s17
      %23 = dma.hbm_to_vmem [thread:$0]  %s16, 8192, %s18, [#allocation4], 128, 128, 8
    $region5: #{tpu_custom_call.1} parent=1 // pred_fallthru
      _
    // Predicated region
    $region6: #{tpu_custom_call.1} parent=1 // pred_check
      _
    $region7: #{tpu_custom_call.1} parent=1 // pred_check_branch
      %25 = sbr.rel (0) target = $region9
    $region8: #{tpu_custom_call.1} parent=1 // pred_region
      %27 = vsyncadd [#allocation7], 0
      %s28 = sshll.u32 %s1, 4
      %s29 = int_to_ptr.hbm [resolvable:$true] %s28
      %s30 = sshll.u32 [#allocation6], 4
      %s31 = int_to_ptr.vmem [resolvable:$true] %s30
      %36 = dma.hbm_to_vmem [thread:$0]  %s29, 2048, %s31, [#allocation7], 128, 128, 8
    $region9: #{tpu_custom_call.1} parent=1 // pred_fallthru
      _
    // Predicated region
    $region10: #{tpu_custom_call.1} parent=1 // pred_check
      _
    $region11: #{tpu_custom_call.1} parent=1 // pred_check_branch
      %38 = sbr.rel (0) target = $region13
    $region12: #{tpu_custom_call.1} parent=1 // pred_region
      _
    $region13: #{tpu_custom_call.1} parent=1 // pred_fallthru
      _
    // Predicated region
    $region14: #{tpu_custom_call.1} parent=1 // pred_check
      _
    $region15: #{tpu_custom_call.1} parent=1 // pred_check_branch
      %40 = sbr.rel (0) target = $region17
    $region16: #{tpu_custom_call.1} parent=1 // pred_region
      %42 = dma.done [#allocation4], 8192
    $region17: #{tpu_custom_call.1} parent=1 // pred_fallthru
      _
    // Predicated region
    $region18: #{tpu_custom_call.1} parent=1 // pred_check
      _
    $region19: #{tpu_custom_call.1} parent=1 // pred_check_branch
      %44 = sbr.rel (0) target = $region21
    $region20: #{tpu_custom_call.1} parent=1 // pred_region
      %46 = dma.done [#allocation7], 2048
    $region21: #{tpu_custom_call.1} parent=1 // pred_fallthru
      _
    %p47 = scmp.eq.s32.totalorder 0, 0
    // Predicated region
    $region22: #{tpu_custom_call.1} parent=1 // pred_check
      %p48 = pneg %p47
    $region23: #{tpu_custom_call.1} parent=1 // pred_check_branch
      %50 = sbr.rel (%p48) target = $region25
    $region24: #{tpu_custom_call.1} parent=1 // pred_region
      %51 = vst [vmem:[#allocation2] sm:$0xff] 0.0
      %52 = vst [vmem:[#allocation2 + $0x8] sm:$0xff] 0.0
      %53 = vst [vmem:[#allocation2 + $0x10] sm:$0xff] 0.0
      %54 = vst [vmem:[#allocation2 + $0x18] sm:$0xff] 0.0
      %55 = vst [vmem:[#allocation2 + $0x20] sm:$0xff] 0.0
      %56 = vst [vmem:[#allocation2 + $0x28] sm:$0xff] 0.0
      %57 = vst [vmem:[#allocation2 + $0x30] sm:$0xff] 0.0
      %58 = vst [vmem:[#allocation2 + $0x38] sm:$0xff] 0.0
      %59 = vst [vmem:[#allocation2 + $0x40] sm:$0xff] 0.0
      %60 = vst [vmem:[#allocation2 + $0x48] sm:$0xff] 0.0
      %61 = vst [vmem:[#allocation2 + $0x50] sm:$0xff] 0.0
      %62 = vst [vmem:[#allocation2 + $0x58] sm:$0xff] 0.0
      %63 = vst [vmem:[#allocation2 + $0x60] sm:$0xff] 0.0
      %64 = vst [vmem:[#allocation2 + $0x68] sm:$0xff] 0.0
      %65 = vst [vmem:[#allocation2 + $0x70] sm:$0xff] 0.0
      %66 = vst [vmem:[#allocation2 + $0x78] sm:$0xff] 0.0
      %67 = vst [vmem:[#allocation2 + $0x80] sm:$0xff] 0.0
      %68 = vst [vmem:[#allocation2 + $0x88] sm:$0xff] 0.0
      %69 = vst [vmem:[#allocation2 + $0x90] sm:$0xff] 0.0
      %70 = vst [vmem:[#allocation2 + $0x98] sm:$0xff] 0.0
      %71 = vst [vmem:[#allocation2 + $0xa0] sm:$0xff] 0.0
      %72 = vst [vmem:[#allocation2 + $0xa8] sm:$0xff] 0.0
      %73 = vst [vmem:[#allocation2 + $0xb0] sm:$0xff] 0.0
      %74 = vst [vmem:[#allocation2 + $0xb8] sm:$0xff] 0.0
      %75 = vst [vmem:[#allocation2 + $0xc0] sm:$0xff] 0.0
      %76 = vst [vmem:[#allocation2 + $0xc8] sm:$0xff] 0.0
      %77 = vst [vmem:[#allocation2 + $0xd0] sm:$0xff] 0.0
      %78 = vst [vmem:[#allocation2 + $0xd8] sm:$0xff] 0.0
      %79 = vst [vmem:[#allocation2 + $0xe0] sm:$0xff] 0.0
      %80 = vst [vmem:[#allocation2 + $0xe8] sm:$0xff] 0.0
      %81 = vst [vmem:[#allocation2 + $0xf0] sm:$0xff] 0.0
      %82 = vst [vmem:[#allocation2 + $0xf8] sm:$0xff] 0.0
      %83 = vst [vmem:[#allocation2 + $0x100] sm:$0xff] 0.0
      %84 = vst [vmem:[#allocation2 + $0x108] sm:$0xff] 0.0
      %85 = vst [vmem:[#allocation2 + $0x110] sm:$0xff] 0.0
      %86 = vst [vmem:[#allocation2 + $0x118] sm:$0xff] 0.0
      %87 = vst [vmem:[#allocation2 + $0x120] sm:$0xff] 0.0
      %88 = vst [vmem:[#allocation2 + $0x128] sm:$0xff] 0.0
      %89 = vst [vmem:[#allocation2 + $0x130] sm:$0xff] 0.0
      %90 = vst [vmem:[#allocation2 + $0x138] sm:$0xff] 0.0
      %91 = vst [vmem:[#allocation2 + $0x140] sm:$0xff] 0.0
      %92 = vst [vmem:[#allocation2 + $0x148] sm:$0xff] 0.0
      %93 = vst [vmem:[#allocation2 + $0x150] sm:$0xff] 0.0
      %94 = vst [vmem:[#allocation2 + $0x158] sm:$0xff] 0.0
      %95 = vst [vmem:[#allocation2 + $0x160] sm:$0xff] 0.0
      %96 = vst [vmem:[#allocation2 + $0x168] sm:$0xff] 0.0
      %97 = vst [vmem:[#allocation2 + $0x170] sm:$0xff] 0.0
      %98 = vst [vmem:[#allocation2 + $0x178] sm:$0xff] 0.0
      %99 = vst [vmem:[#allocation2 + $0x180] sm:$0xff] 0.0
      %100 = vst [vmem:[#allocation2 + $0x188] sm:$0xff] 0.0
      %101 = vst [vmem:[#allocation2 + $0x190] sm:$0xff] 0.0
      %102 = vst [vmem:[#allocation2 + $0x198] sm:$0xff] 0.0
      %103 = vst [vmem:[#allocation2 + $0x1a0] sm:$0xff] 0.0
      %104 = vst [vmem:[#allocation2 + $0x1a8] sm:$0xff] 0.0
      %105 = vst [vmem:[#allocation2 + $0x1b0] sm:$0xff] 0.0
      %106 = vst [vmem:[#allocation2 + $0x1b8] sm:$0xff] 0.0
      %107 = vst [vmem:[#allocation2 + $0x1c0] sm:$0xff] 0.0
      %108 = vst [vmem:[#allocation2 + $0x1c8] sm:$0xff] 0.0
      %109 = vst [vmem:[#allocation2 + $0x1d0] sm:$0xff] 0.0
      %110 = vst [vmem:[#allocation2 + $0x1d8] sm:$0xff] 0.0
      %111 = vst [vmem:[#allocation2 + $0x1e0] sm:$0xff] 0.0
      %112 = vst [vmem:[#allocation2 + $0x1e8] sm:$0xff] 0.0
      %113 = vst [vmem:[#allocation2 + $0x1f0] sm:$0xff] 0.0
      %114 = vst [vmem:[#allocation2 + $0x1f8] sm:$0xff] 0.0
    $region25: #{tpu_custom_call.1} parent=1 // pred_fallthru
      _
    %v115 = vld [vmem:[#allocation2] sm:$0xff]
    %v116 = vld [vmem:[#allocation2 + $0x8] sm:$0xff]
    %v117 = vld [vmem:[#allocation2 + $0x10] sm:$0xff]
    %v118 = vld [vmem:[#allocation2 + $0x18] sm:$0xff]
    %v119 = vld [vmem:[#allocation2 + $0x20] sm:$0xff]
    %v120 = vld [vmem:[#allocation2 + $0x28] sm:$0xff]
    %v121 = vld [vmem:[#allocation2 + $0x30] sm:$0xff]
    %v122 = vld [vmem:[#allocation2 + $0x38] sm:$0xff]
    %v123 = vld [vmem:[#allocation2 + $0x40] sm:$0xff]
    %v124 = vld [vmem:[#allocation2 + $0x48] sm:$0xff]
    %v125 = vld [vmem:[#allocation2 + $0x50] sm:$0xff]
    %v126 = vld [vmem:[#allocation2 + $0x58] sm:$0xff]
    %v127 = vld [vmem:[#allocation2 + $0x60] sm:$0xff]
    %v128 = vld [vmem:[#allocation2 + $0x68] sm:$0xff]
    %v129 = vld [vmem:[#allocation2 + $0x70] sm:$0xff]
    %v130 = vld [vmem:[#allocation2 + $0x78] sm:$0xff]
    %v131 = vld [vmem:[#allocation2 + $0x80] sm:$0xff]
    %v132 = vld [vmem:[#allocation2 + $0x88] sm:$0xff]
    %v133 = vld [vmem:[#allocation2 + $0x90] sm:$0xff]
    %v134 = vld [vmem:[#allocation2 + $0x98] sm:$0xff]
    %v135 = vld [vmem:[#allocation2 + $0xa0] sm:$0xff]
    %v136 = vld [vmem:[#allocation2 + $0xa8] sm:$0xff]
    %v137 = vld [vmem:[#allocation2 + $0xb0] sm:$0xff]
    %v138 = vld [vmem:[#allocation2 + $0xb8] sm:$0xff]
    %v139 = vld [vmem:[#allocation2 + $0xc0] sm:$0xff]
    %v140 = vld [vmem:[#allocation2 + $0xc8] sm:$0xff]
    %v141 = vld [vmem:[#allocation2 + $0xd0] sm:$0xff]
    %v142 = vld [vmem:[#allocation2 + $0xd8] sm:$0xff]
    %v143 = vld [vmem:[#allocation2 + $0xe0] sm:$0xff]
    %v144 = vld [vmem:[#allocation2 + $0xe8] sm:$0xff]
    %v145 = vld [vmem:[#allocation2 + $0xf0] sm:$0xff]
    %v146 = vld [vmem:[#allocation2 + $0xf8] sm:$0xff]
    %v147 = vld [vmem:[#allocation2 + $0x100] sm:$0xff]
    %v148 = vld [vmem:[#allocation2 + $0x108] sm:$0xff]
    %v149 = vld [vmem:[#allocation2 + $0x110] sm:$0xff]
    %v150 = vld [vmem:[#allocation2 + $0x118] sm:$0xff]
    %v151 = vld [vmem:[#allocation2 + $0x120] sm:$0xff]
    %v152 = vld [vmem:[#allocation2 + $0x128] sm:$0xff]
    %v153 = vld [vmem:[#allocation2 + $0x130] sm:$0xff]
    %v154 = vld [vmem:[#allocation2 + $0x138] sm:$0xff]
    %v155 = vld [vmem:[#allocation2 + $0x140] sm:$0xff]
    %v156 = vld [vmem:[#allocation2 + $0x148] sm:$0xff]
    %v157 = vld [vmem:[#allocation2 + $0x150] sm:$0xff]
    %v158 = vld [vmem:[#allocation2 + $0x158] sm:$0xff]
    %v159 = vld [vmem:[#allocation2 + $0x160] sm:$0xff]
    %v160 = vld [vmem:[#allocation2 + $0x168] sm:$0xff]
    %v161 = vld [vmem:[#allocation2 + $0x170] sm:$0xff]
    %v162 = vld [vmem:[#allocation2 + $0x178] sm:$0xff]
    %v163 = vld [vmem:[#allocation2 + $0x180] sm:$0xff]
    %v164 = vld [vmem:[#allocation2 + $0x188] sm:$0xff]
    %v165 = vld [vmem:[#allocation2 + $0x190] sm:$0xff]
    %v166 = vld [vmem:[#allocation2 + $0x198] sm:$0xff]
    %v167 = vld [vmem:[#allocation2 + $0x1a0] sm:$0xff]
    %v168 = vld [vmem:[#allocation2 + $0x1a8] sm:$0xff]
    %v169 = vld [vmem:[#allocation2 + $0x1b0] sm:$0xff]
    %v170 = vld [vmem:[#allocation2 + $0x1b8] sm:$0xff]
    %v171 = vld [vmem:[#allocation2 + $0x1c0] sm:$0xff]
    %v172 = vld [vmem:[#allocation2 + $0x1c8] sm:$0xff]
    %v173 = vld [vmem:[#allocation2 + $0x1d0] sm:$0xff]
    %v174 = vld [vmem:[#allocation2 + $0x1d8] sm:$0xff]
    %v175 = vld [vmem:[#allocation2 + $0x1e0] sm:$0xff]
    %v176 = vld [vmem:[#allocation2 + $0x1e8] sm:$0xff]
    %v177 = vld [vmem:[#allocation2 + $0x1f0] sm:$0xff]
    %v178 = vld [vmem:[#allocation2 + $0x1f8] sm:$0xff]
    %v179 = vld [vmem:[#allocation3] sm:$0xff]
    %v180 = vld [vmem:[#allocation3 + $0x8] sm:$0xff]
    %v181 = vld [vmem:[#allocation3 + $0x10] sm:$0xff]
    %v182 = vld [vmem:[#allocation3 + $0x18] sm:$0xff]
    %v183 = vld [vmem:[#allocation3 + $0x20] sm:$0xff]
    %v184 = vld [vmem:[#allocation3 + $0x28] sm:$0xff]
    %v185 = vld [vmem:[#allocation3 + $0x30] sm:$0xff]
    %v186 = vld [vmem:[#allocation3 + $0x38] sm:$0xff]
    %v187 = vld [vmem:[#allocation3 + $0x40] sm:$0xff]
    %v188 = vld [vmem:[#allocation3 + $0x48] sm:$0xff]
    %v189 = vld [vmem:[#allocation3 + $0x50] sm:$0xff]
    %v190 = vld [vmem:[#allocation3 + $0x58] sm:$0xff]
    %v191 = vld [vmem:[#allocation3 + $0x60] sm:$0xff]
    %v192 = vld [vmem:[#allocation3 + $0x68] sm:$0xff]
    %v193 = vld [vmem:[#allocation3 + $0x70] sm:$0xff]
    %v194 = vld [vmem:[#allocation3 + $0x78] sm:$0xff]
    %v195 = vld [vmem:[#allocation3 + $0x80] sm:$0xff]
    %v196 = vld [vmem:[#allocation3 + $0x88] sm:$0xff]
    %v197 = vld [vmem:[#allocation3 + $0x90] sm:$0xff]
    %v198 = vld [vmem:[#allocation3 + $0x98] sm:$0xff]
    %v199 = vld [vmem:[#allocation3 + $0xa0] sm:$0xff]
    %v200 = vld [vmem:[#allocation3 + $0xa8] sm:$0xff]
    %v201 = vld [vmem:[#allocation3 + $0xb0] sm:$0xff]
    %v202 = vld [vmem:[#allocation3 + $0xb8] sm:$0xff]
    %v203 = vld [vmem:[#allocation3 + $0xc0] sm:$0xff]
    %v204 = vld [vmem:[#allocation3 + $0xc8] sm:$0xff]
    %v205 = vld [vmem:[#allocation3 + $0xd0] sm:$0xff]
    %v206 = vld [vmem:[#allocation3 + $0xd8] sm:$0xff]
    %v207 = vld [vmem:[#allocation3 + $0xe0] sm:$0xff]
    %v208 = vld [vmem:[#allocation3 + $0xe8] sm:$0xff]
    %v209 = vld [vmem:[#allocation3 + $0xf0] sm:$0xff]
    %v210 = vld [vmem:[#allocation3 + $0xf8] sm:$0xff]
    %v211 = vld [vmem:[#allocation3 + $0x100] sm:$0xff]
    %v212 = vld [vmem:[#allocation3 + $0x108] sm:$0xff]
    %v213 = vld [vmem:[#allocation3 + $0x110] sm:$0xff]
    %v214 = vld [vmem:[#allocation3 + $0x118] sm:$0xff]
    %v215 = vld [vmem:[#allocation3 + $0x120] sm:$0xff]
    %v216 = vld [vmem:[#allocation3 + $0x128] sm:$0xff]
    %v217 = vld [vmem:[#allocation3 + $0x130] sm:$0xff]
    %v218 = vld [vmem:[#allocation3 + $0x138] sm:$0xff]
    %v219 = vld [vmem:[#allocation3 + $0x140] sm:$0xff]
    %v220 = vld [vmem:[#allocation3 + $0x148] sm:$0xff]
    %v221 = vld [vmem:[#allocation3 + $0x150] sm:$0xff]
    %v222 = vld [vmem:[#allocation3 + $0x158] sm:$0xff]
    %v223 = vld [vmem:[#allocation3 + $0x160] sm:$0xff]
    %v224 = vld [vmem:[#allocation3 + $0x168] sm:$0xff]
    %v225 = vld [vmem:[#allocation3 + $0x170] sm:$0xff]
    %v226 = vld [vmem:[#allocation3 + $0x178] sm:$0xff]
    %v227 = vld [vmem:[#allocation3 + $0x180] sm:$0xff]
    %v228 = vld [vmem:[#allocation3 + $0x188] sm:$0xff]
    %v229 = vld [vmem:[#allocation3 + $0x190] sm:$0xff]
    %v230 = vld [vmem:[#allocation3 + $0x198] sm:$0xff]
    %v231 = vld [vmem:[#allocation3 + $0x1a0] sm:$0xff]
    %v232 = vld [vmem:[#allocation3 + $0x1a8] sm:$0xff]
    %v233 = vld [vmem:[#allocation3 + $0x1b0] sm:$0xff]
    %v234 = vld [vmem:[#allocation3 + $0x1b8] sm:$0xff]
    %v235 = vld [vmem:[#allocation3 + $0x1c0] sm:$0xff]
    %v236 = vld [vmem:[#allocation3 + $0x1c8] sm:$0xff]
    %v237 = vld [vmem:[#allocation3 + $0x1d0] sm:$0xff]
    %v238 = vld [vmem:[#allocation3 + $0x1d8] sm:$0xff]
    %v239 = vld [vmem:[#allocation3 + $0x1e0] sm:$0xff]
    %v240 = vld [vmem:[#allocation3 + $0x1e8] sm:$0xff]
    %v241 = vld [vmem:[#allocation3 + $0x1f0] sm:$0xff]
    %v242 = vld [vmem:[#allocation3 + $0x1f8] sm:$0xff]
    %v243 = vld [vmem:[#allocation6] sm:$0xff]
    %v244 = vld [vmem:[#allocation6 + $0x8] sm:$0xff]
    %v245 = vld [vmem:[#allocation6 + $0x10] sm:$0xff]
    %v246 = vld [vmem:[#allocation6 + $0x18] sm:$0xff]
    %v247 = vld [vmem:[#allocation6 + $0x20] sm:$0xff]
    %v248 = vld [vmem:[#allocation6 + $0x28] sm:$0xff]
    %v249 = vld [vmem:[#allocation6 + $0x30] sm:$0xff]
    %v250 = vld [vmem:[#allocation6 + $0x38] sm:$0xff]
    %v251 = vld [vmem:[#allocation6 + $0x40] sm:$0xff]
    %v252 = vld [vmem:[#allocation6 + $0x48] sm:$0xff]
    %v253 = vld [vmem:[#allocation6 + $0x50] sm:$0xff]
    %v254 = vld [vmem:[#allocation6 + $0x58] sm:$0xff]
    %v255 = vld [vmem:[#allocation6 + $0x60] sm:$0xff]
    %v256 = vld [vmem:[#allocation6 + $0x68] sm:$0xff]
    %v257 = vld [vmem:[#allocation6 + $0x70] sm:$0xff]
    %v258 = vld [vmem:[#allocation6 + $0x78] sm:$0xff]
    %259 = vmatpush.msra.mxu0 %v258
    %260 = vmatpush.msra.mxu0 %v257
    %261 = vmatpush.msra.mxu0 %v256
    %262 = vmatpush.msra.mxu0 %v255
    %263 = vmatpush.msra.mxu0 %v254
    %264 = vmatpush.msra.mxu0 %v253
    %265 = vmatpush.msra.mxu0 %v252
    %266 = vmatpush.msra.mxu0 %v251
    %267 = vmatpush.msra.mxu0 %v250
    %268 = vmatpush.msra.mxu0 %v249
    %269 = vmatpush.msra.mxu0 %v248
    %270 = vmatpush.msra.mxu0 %v247
    %271 = vmatpush.msra.mxu0 %v246
    %272 = vmatpush.msra.mxu0 %v245
    %273 = vmatpush.msra.mxu0 %v244
    %274 = vmatpush.msra.mxu0 %v243
    %275 = vmatmul.f32.gmra.mxu0 %v179
    %v276 = vpop.f32.mrf.mxu0
    %v277 = vadd.f32 0.0, %v276
    %278 = vmatmul.f32.gmra.mxu0 %v180
    %v279 = vpop.f32.mrf.mxu0
    %v280 = vadd.f32 0.0, %v279
    %281 = vmatmul.f32.gmra.mxu0 %v181
    %v282 = vpop.f32.mrf.mxu0
    %v283 = vadd.f32 0.0, %v282
    %284 = vmatmul.f32.gmra.mxu0 %v182
    %v285 = vpop.f32.mrf.mxu0
    %v286 = vadd.f32 0.0, %v285
    %287 = vmatmul.f32.gmra.mxu0 %v183
    %v288 = vpop.f32.mrf.mxu0
    %v289 = vadd.f32 0.0, %v288
    %290 = vmatmul.f32.gmra.mxu0 %v184
    %v291 = vpop.f32.mrf.mxu0
    %v292 = vadd.f32 0.0, %v291
    %293 = vmatmul.f32.gmra.mxu0 %v185
    %v294 = vpop.f32.mrf.mxu0
    %v295 = vadd.f32 0.0, %v294
    %296 = vmatmul.f32.gmra.mxu0 %v186
    %v297 = vpop.f32.mrf.mxu0
    %v298 = vadd.f32 0.0, %v297
    %299 = vmatmul.f32.gmra.mxu0 %v187
    %v300 = vpop.f32.mrf.mxu0
    %v301 = vadd.f32 0.0, %v300
    %302 = vmatmul.f32.gmra.mxu0 %v188
    %v303 = vpop.f32.mrf.mxu0
    %v304 = vadd.f32 0.0, %v303
    %305 = vmatmul.f32.gmra.mxu0 %v189
    %v306 = vpop.f32.mrf.mxu0
    %v307 = vadd.f32 0.0, %v306
    %308 = vmatmul.f32.gmra.mxu0 %v190
    %v309 = vpop.f32.mrf.mxu0
    %v310 = vadd.f32 0.0, %v309
    %311 = vmatmul.f32.gmra.mxu0 %v191
    %v312 = vpop.f32.mrf.mxu0
    %v313 = vadd.f32 0.0, %v312
    %314 = vmatmul.f32.gmra.mxu0 %v192
    %v315 = vpop.f32.mrf.mxu0
    %v316 = vadd.f32 0.0, %v315
    %317 = vmatmul.f32.gmra.mxu0 %v193
    %v318 = vpop.f32.mrf.mxu0
    %v319 = vadd.f32 0.0, %v318
    %320 = vmatmul.f32.gmra.mxu0 %v194
    %v321 = vpop.f32.mrf.mxu0
    %v322 = vadd.f32 0.0, %v321
    %323 = vmatmul.f32.gmra.mxu0 %v195
    %v324 = vpop.f32.mrf.mxu0
    %v325 = vadd.f32 0.0, %v324
    %326 = vmatmul.f32.gmra.mxu0 %v196
    %v327 = vpop.f32.mrf.mxu0
    %v328 = vadd.f32 0.0, %v327
    %329 = vmatmul.f32.gmra.mxu0 %v197
    %v330 = vpop.f32.mrf.mxu0
    %v331 = vadd.f32 0.0, %v330
    %332 = vmatmul.f32.gmra.mxu0 %v198
    %v333 = vpop.f32.mrf.mxu0
    %v334 = vadd.f32 0.0, %v333
    %335 = vmatmul.f32.gmra.mxu0 %v199
    %v336 = vpop.f32.mrf.mxu0
    %v337 = vadd.f32 0.0, %v336
    %338 = vmatmul.f32.gmra.mxu0 %v200
    %v339 = vpop.f32.mrf.mxu0
    %v340 = vadd.f32 0.0, %v339
    %341 = vmatmul.f32.gmra.mxu0 %v201
    %v342 = vpop.f32.mrf.mxu0
    %v343 = vadd.f32 0.0, %v342
    %344 = vmatmul.f32.gmra.mxu0 %v202
    %v345 = vpop.f32.mrf.mxu0
    %v346 = vadd.f32 0.0, %v345
    %347 = vmatmul.f32.gmra.mxu0 %v203
    %v348 = vpop.f32.mrf.mxu0
    %v349 = vadd.f32 0.0, %v348
    %350 = vmatmul.f32.gmra.mxu0 %v204
    %v351 = vpop.f32.mrf.mxu0
    %v352 = vadd.f32 0.0, %v351
    %353 = vmatmul.f32.gmra.mxu0 %v205
    %v354 = vpop.f32.mrf.mxu0
    %v355 = vadd.f32 0.0, %v354
    %356 = vmatmul.f32.gmra.mxu0 %v206
    %v357 = vpop.f32.mrf.mxu0
    %v358 = vadd.f32 0.0, %v357
    %359 = vmatmul.f32.gmra.mxu0 %v207
    %v360 = vpop.f32.mrf.mxu0
    %v361 = vadd.f32 0.0, %v360
    %362 = vmatmul.f32.gmra.mxu0 %v208
    %v363 = vpop.f32.mrf.mxu0
    %v364 = vadd.f32 0.0, %v363
    %365 = vmatmul.f32.gmra.mxu0 %v209
    %v366 = vpop.f32.mrf.mxu0
    %v367 = vadd.f32 0.0, %v366
    %368 = vmatmul.f32.gmra.mxu0 %v210
    %v369 = vpop.f32.mrf.mxu0
    %v370 = vadd.f32 0.0, %v369
    %371 = vmatmul.f32.gmra.mxu0 %v211
    %v372 = vpop.f32.mrf.mxu0
    %v373 = vadd.f32 0.0, %v372
    %374 = vmatmul.f32.gmra.mxu0 %v212
    %v375 = vpop.f32.mrf.mxu0
    %v376 = vadd.f32 0.0, %v375
    %377 = vmatmul.f32.gmra.mxu0 %v213
    %v378 = vpop.f32.mrf.mxu0
    %v379 = vadd.f32 0.0, %v378
    %380 = vmatmul.f32.gmra.mxu0 %v214
    %v381 = vpop.f32.mrf.mxu0
    %v382 = vadd.f32 0.0, %v381
    %383 = vmatmul.f32.gmra.mxu0 %v215
    %v384 = vpop.f32.mrf.mxu0
    %v385 = vadd.f32 0.0, %v384
    %386 = vmatmul.f32.gmra.mxu0 %v216
    %v387 = vpop.f32.mrf.mxu0
    %v388 = vadd.f32 0.0, %v387
    %389 = vmatmul.f32.gmra.mxu0 %v217
    %v390 = vpop.f32.mrf.mxu0
    %v391 = vadd.f32 0.0, %v390
    %392 = vmatmul.f32.gmra.mxu0 %v218
    %v393 = vpop.f32.mrf.mxu0
    %v394 = vadd.f32 0.0, %v393
    %395 = vmatmul.f32.gmra.mxu0 %v219
    %v396 = vpop.f32.mrf.mxu0
    %v397 = vadd.f32 0.0, %v396
    %398 = vmatmul.f32.gmra.mxu0 %v220
    %v399 = vpop.f32.mrf.mxu0
    %v400 = vadd.f32 0.0, %v399
    %401 = vmatmul.f32.gmra.mxu0 %v221
    %v402 = vpop.f32.mrf.mxu0
    %v403 = vadd.f32 0.0, %v402
    %404 = vmatmul.f32.gmra.mxu0 %v222
    %v405 = vpop.f32.mrf.mxu0
    %v406 = vadd.f32 0.0, %v405
    %407 = vmatmul.f32.gmra.mxu0 %v223
    %v408 = vpop.f32.mrf.mxu0
    %v409 = vadd.f32 0.0, %v408
    %410 = vmatmul.f32.gmra.mxu0 %v224
    %v411 = vpop.f32.mrf.mxu0
    %v412 = vadd.f32 0.0, %v411
    %413 = vmatmul.f32.gmra.mxu0 %v225
    %v414 = vpop.f32.mrf.mxu0
    %v415 = vadd.f32 0.0, %v414
    %416 = vmatmul.f32.gmra.mxu0 %v226
    %v417 = vpop.f32.mrf.mxu0
    %v418 = vadd.f32 0.0, %v417
    %419 = vmatmul.f32.gmra.mxu0 %v227
    %v420 = vpop.f32.mrf.mxu0
    %v421 = vadd.f32 0.0, %v420
    %422 = vmatmul.f32.gmra.mxu0 %v228
    %v423 = vpop.f32.mrf.mxu0
    %v424 = vadd.f32 0.0, %v423
    %425 = vmatmul.f32.gmra.mxu0 %v229
    %v426 = vpop.f32.mrf.mxu0
    %v427 = vadd.f32 0.0, %v426
    %428 = vmatmul.f32.gmra.mxu0 %v230
    %v429 = vpop.f32.mrf.mxu0
    %v430 = vadd.f32 0.0, %v429
    %431 = vmatmul.f32.gmra.mxu0 %v231
    %v432 = vpop.f32.mrf.mxu0
    %v433 = vadd.f32 0.0, %v432
    %434 = vmatmul.f32.gmra.mxu0 %v232
    %v435 = vpop.f32.mrf.mxu0
    %v436 = vadd.f32 0.0, %v435
    %437 = vmatmul.f32.gmra.mxu0 %v233
    %v438 = vpop.f32.mrf.mxu0
    %v439 = vadd.f32 0.0, %v438
    %440 = vmatmul.f32.gmra.mxu0 %v234
    %v441 = vpop.f32.mrf.mxu0
    %v442 = vadd.f32 0.0, %v441
    %443 = vmatmul.f32.gmra.mxu0 %v235
    %v444 = vpop.f32.mrf.mxu0
    %v445 = vadd.f32 0.0, %v444
    %446 = vmatmul.f32.gmra.mxu0 %v236
    %v447 = vpop.f32.mrf.mxu0
    %v448 = vadd.f32 0.0, %v447
    %449 = vmatmul.f32.gmra.mxu0 %v237
    %v450 = vpop.f32.mrf.mxu0
    %v451 = vadd.f32 0.0, %v450
    %452 = vmatmul.f32.gmra.mxu0 %v238
    %v453 = vpop.f32.mrf.mxu0
    %v454 = vadd.f32 0.0, %v453
    %455 = vmatmul.f32.gmra.mxu0 %v239
    %v456 = vpop.f32.mrf.mxu0
    %v457 = vadd.f32 0.0, %v456
    %458 = vmatmul.f32.gmra.mxu0 %v240
    %v459 = vpop.f32.mrf.mxu0
    %v460 = vadd.f32 0.0, %v459
    %461 = vmatmul.f32.gmra.mxu0 %v241
    %v462 = vpop.f32.mrf.mxu0
    %v463 = vadd.f32 0.0, %v462
    %464 = vmatmul.f32.gmra.mxu0 %v242
    %v465 = vpop.f32.mrf.mxu0
    %v466 = vadd.f32 0.0, %v465
    %467 = vdwg.mxu0
    %v468 = vadd.f32 %v115, %v277
    %v469 = vadd.f32 %v116, %v280
    %v470 = vadd.f32 %v117, %v283
    %v471 = vadd.f32 %v118, %v286
    %v472 = vadd.f32 %v119, %v289
    %v473 = vadd.f32 %v120, %v292
    %v474 = vadd.f32 %v121, %v295
    %v475 = vadd.f32 %v122, %v298
    %v476 = vadd.f32 %v123, %v301
    %v477 = vadd.f32 %v124, %v304
    %v478 = vadd.f32 %v125, %v307
    %v479 = vadd.f32 %v126, %v310
    %v480 = vadd.f32 %v127, %v313
    %v481 = vadd.f32 %v128, %v316
    %v482 = vadd.f32 %v129, %v319
    %v483 = vadd.f32 %v130, %v322
    %v484 = vadd.f32 %v131, %v325
    %v485 = vadd.f32 %v132, %v328
    %v486 = vadd.f32 %v133, %v331
    %v487 = vadd.f32 %v134, %v334
    %v488 = vadd.f32 %v135, %v337
    %v489 = vadd.f32 %v136, %v340
    %v490 = vadd.f32 %v137, %v343
    %v491 = vadd.f32 %v138, %v346
    %v492 = vadd.f32 %v139, %v349
    %v493 = vadd.f32 %v140, %v352
    %v494 = vadd.f32 %v141, %v355
    %v495 = vadd.f32 %v142, %v358
    %v496 = vadd.f32 %v143, %v361
    %v497 = vadd.f32 %v144, %v364
    %v498 = vadd.f32 %v145, %v367
    %v499 = vadd.f32 %v146, %v370
    %v500 = vadd.f32 %v147, %v373
    %v501 = vadd.f32 %v148, %v376
    %v502 = vadd.f32 %v149, %v379
    %v503 = vadd.f32 %v150, %v382
    %v504 = vadd.f32 %v151, %v385
    %v505 = vadd.f32 %v152, %v388
    %v506 = vadd.f32 %v153, %v391
    %v507 = vadd.f32 %v154, %v394
    %v508 = vadd.f32 %v155, %v397
    %v509 = vadd.f32 %v156, %v400
    %v510 = vadd.f32 %v157, %v403
    %v511 = vadd.f32 %v158, %v406
    %v512 = vadd.f32 %v159, %v409
    %v513 = vadd.f32 %v160, %v412
    %v514 = vadd.f32 %v161, %v415
    %v515 = vadd.f32 %v162, %v418
    %v516 = vadd.f32 %v163, %v421
    %v517 = vadd.f32 %v164, %v424
    %v518 = vadd.f32 %v165, %v427
    %v519 = vadd.f32 %v166, %v430
    %v520 = vadd.f32 %v167, %v433
    %v521 = vadd.f32 %v168, %v436
    %v522 = vadd.f32 %v169, %v439
    %v523 = vadd.f32 %v170, %v442
    %v524 = vadd.f32 %v171, %v445
    %v525 = vadd.f32 %v172, %v448
    %v526 = vadd.f32 %v173, %v451
    %v527 = vadd.f32 %v174, %v454
    %v528 = vadd.f32 %v175, %v457
    %v529 = vadd.f32 %v176, %v460
    %v530 = vadd.f32 %v177, %v463
    %v531 = vadd.f32 %v178, %v466
    %532 = vst [vmem:[#allocation2] sm:$0xff] %v468
    %533 = vst [vmem:[#allocation2 + $0x8] sm:$0xff] %v469
    %534 = vst [vmem:[#allocation2 + $0x10] sm:$0xff] %v470
    %535 = vst [vmem:[#allocation2 + $0x18] sm:$0xff] %v471
    %536 = vst [vmem:[#allocation2 + $0x20] sm:$0xff] %v472
    %537 = vst [vmem:[#allocation2 + $0x28] sm:$0xff] %v473
    %538 = vst [vmem:[#allocation2 + $0x30] sm:$0xff] %v474
    %539 = vst [vmem:[#allocation2 + $0x38] sm:$0xff] %v475
    %540 = vst [vmem:[#allocation2 + $0x40] sm:$0xff] %v476
    %541 = vst [vmem:[#allocation2 + $0x48] sm:$0xff] %v477
    %542 = vst [vmem:[#allocation2 + $0x50] sm:$0xff] %v478
    %543 = vst [vmem:[#allocation2 + $0x58] sm:$0xff] %v479
    %544 = vst [vmem:[#allocation2 + $0x60] sm:$0xff] %v480
    %545 = vst [vmem:[#allocation2 + $0x68] sm:$0xff] %v481
    %546 = vst [vmem:[#allocation2 + $0x70] sm:$0xff] %v482
    %547 = vst [vmem:[#allocation2 + $0x78] sm:$0xff] %v483
    %548 = vst [vmem:[#allocation2 + $0x80] sm:$0xff] %v484
    %549 = vst [vmem:[#allocation2 + $0x88] sm:$0xff] %v485
    %550 = vst [vmem:[#allocation2 + $0x90] sm:$0xff] %v486
    %551 = vst [vmem:[#allocation2 + $0x98] sm:$0xff] %v487
    %552 = vst [vmem:[#allocation2 + $0xa0] sm:$0xff] %v488
    %553 = vst [vmem:[#allocation2 + $0xa8] sm:$0xff] %v489
    %554 = vst [vmem:[#allocation2 + $0xb0] sm:$0xff] %v490
    %555 = vst [vmem:[#allocation2 + $0xb8] sm:$0xff] %v491
    %556 = vst [vmem:[#allocation2 + $0xc0] sm:$0xff] %v492
    %557 = vst [vmem:[#allocation2 + $0xc8] sm:$0xff] %v493
    %558 = vst [vmem:[#allocation2 + $0xd0] sm:$0xff] %v494
    %559 = vst [vmem:[#allocation2 + $0xd8] sm:$0xff] %v495
    %560 = vst [vmem:[#allocation2 + $0xe0] sm:$0xff] %v496
    %561 = vst [vmem:[#allocation2 + $0xe8] sm:$0xff] %v497
    %562 = vst [vmem:[#allocation2 + $0xf0] sm:$0xff] %v498
    %563 = vst [vmem:[#allocation2 + $0xf8] sm:$0xff] %v499
    %564 = vst [vmem:[#allocation2 + $0x100] sm:$0xff] %v500
    %565 = vst [vmem:[#allocation2 + $0x108] sm:$0xff] %v501
    %566 = vst [vmem:[#allocation2 + $0x110] sm:$0xff] %v502
    %567 = vst [vmem:[#allocation2 + $0x118] sm:$0xff] %v503
    %568 = vst [vmem:[#allocation2 + $0x120] sm:$0xff] %v504
    %569 = vst [vmem:[#allocation2 + $0x128] sm:$0xff] %v505
    %570 = vst [vmem:[#allocation2 + $0x130] sm:$0xff] %v506
    %571 = vst [vmem:[#allocation2 + $0x138] sm:$0xff] %v507
    %572 = vst [vmem:[#allocation2 + $0x140] sm:$0xff] %v508
    %573 = vst [vmem:[#allocation2 + $0x148] sm:$0xff] %v509
    %574 = vst [vmem:[#allocation2 + $0x150] sm:$0xff] %v510
    %575 = vst [vmem:[#allocation2 + $0x158] sm:$0xff] %v511
    %576 = vst [vmem:[#allocation2 + $0x160] sm:$0xff] %v512
    %577 = vst [vmem:[#allocation2 + $0x168] sm:$0xff] %v513
    %578 = vst [vmem:[#allocation2 + $0x170] sm:$0xff] %v514
    %579 = vst [vmem:[#allocation2 + $0x178] sm:$0xff] %v515
    %580 = vst [vmem:[#allocation2 + $0x180] sm:$0xff] %v516
    %581 = vst [vmem:[#allocation2 + $0x188] sm:$0xff] %v517
    %582 = vst [vmem:[#allocation2 + $0x190] sm:$0xff] %v518
    %583 = vst [vmem:[#allocation2 + $0x198] sm:$0xff] %v519
    %584 = vst [vmem:[#allocation2 + $0x1a0] sm:$0xff] %v520
    %585 = vst [vmem:[#allocation2 + $0x1a8] sm:$0xff] %v521
    %586 = vst [vmem:[#allocation2 + $0x1b0] sm:$0xff] %v522
    %587 = vst [vmem:[#allocation2 + $0x1b8] sm:$0xff] %v523
    %588 = vst [vmem:[#allocation2 + $0x1c0] sm:$0xff] %v524
    %589 = vst [vmem:[#allocation2 + $0x1c8] sm:$0xff] %v525
    %590 = vst [vmem:[#allocation2 + $0x1d0] sm:$0xff] %v526
    %591 = vst [vmem:[#allocation2 + $0x1d8] sm:$0xff] %v527
    %592 = vst [vmem:[#allocation2 + $0x1e0] sm:$0xff] %v528
    %593 = vst [vmem:[#allocation2 + $0x1e8] sm:$0xff] %v529
    %594 = vst [vmem:[#allocation2 + $0x1f0] sm:$0xff] %v530
    %595 = vst [vmem:[#allocation2 + $0x1f8] sm:$0xff] %v531
    // Predicated region
    $region26: #{tpu_custom_call.1} parent=1 // pred_check
      %p596 = pneg %p47
    $region27: #{tpu_custom_call.1} parent=1 // pred_check_branch
      %598 = sbr.rel (%p596) target = $region29
    $region28: #{tpu_custom_call.1} parent=1 // pred_region
      %v599 = vld [vmem:[#allocation2] sm:$0xff]
      %v600 = vld [vmem:[#allocation2 + $0x8] sm:$0xff]
      %v601 = vld [vmem:[#allocation2 + $0x10] sm:$0xff]
      %v602 = vld [vmem:[#allocation2 + $0x18] sm:$0xff]
      %v603 = vld [vmem:[#allocation2 + $0x20] sm:$0xff]
      %v604 = vld [vmem:[#allocation2 + $0x28] sm:$0xff]
      %v605 = vld [vmem:[#allocation2 + $0x30] sm:$0xff]
      %v606 = vld [vmem:[#allocation2 + $0x38] sm:$0xff]
      %v607 = vld [vmem:[#allocation2 + $0x40] sm:$0xff]
      %v608 = vld [vmem:[#allocation2 + $0x48] sm:$0xff]
      %v609 = vld [vmem:[#allocation2 + $0x50] sm:$0xff]
      %v610 = vld [vmem:[#allocation2 + $0x58] sm:$0xff]
      %v611 = vld [vmem:[#allocation2 + $0x60] sm:$0xff]
      %v612 = vld [vmem:[#allocation2 + $0x68] sm:$0xff]
      %v613 = vld [vmem:[#allocation2 + $0x70] sm:$0xff]
      %v614 = vld [vmem:[#allocation2 + $0x78] sm:$0xff]
      %v615 = vld [vmem:[#allocation2 + $0x80] sm:$0xff]
      %v616 = vld [vmem:[#allocation2 + $0x88] sm:$0xff]
      %v617 = vld [vmem:[#allocation2 + $0x90] sm:$0xff]
      %v618 = vld [vmem:[#allocation2 + $0x98] sm:$0xff]
      %v619 = vld [vmem:[#allocation2 + $0xa0] sm:$0xff]
      %v620 = vld [vmem:[#allocation2 + $0xa8] sm:$0xff]
      %v621 = vld [vmem:[#allocation2 + $0xb0] sm:$0xff]
      %v622 = vld [vmem:[#allocation2 + $0xb8] sm:$0xff]
      %v623 = vld [vmem:[#allocation2 + $0xc0] sm:$0xff]
      %v624 = vld [vmem:[#allocation2 + $0xc8] sm:$0xff]
      %v625 = vld [vmem:[#allocation2 + $0xd0] sm:$0xff]
      %v626 = vld [vmem:[#allocation2 + $0xd8] sm:$0xff]
      %v627 = vld [vmem:[#allocation2 + $0xe0] sm:$0xff]
      %v628 = vld [vmem:[#allocation2 + $0xe8] sm:$0xff]
      %v629 = vld [vmem:[#allocation2 + $0xf0] sm:$0xff]
      %v630 = vld [vmem:[#allocation2 + $0xf8] sm:$0xff]
      %v631 = vld [vmem:[#allocation2 + $0x100] sm:$0xff]
      %v632 = vld [vmem:[#allocation2 + $0x108] sm:$0xff]
      %v633 = vld [vmem:[#allocation2 + $0x110] sm:$0xff]
      %v634 = vld [vmem:[#allocation2 + $0x118] sm:$0xff]
      %v635 = vld [vmem:[#allocation2 + $0x120] sm:$0xff]
      %v636 = vld [vmem:[#allocation2 + $0x128] sm:$0xff]
      %v637 = vld [vmem:[#allocation2 + $0x130] sm:$0xff]
      %v638 = vld [vmem:[#allocation2 + $0x138] sm:$0xff]
      %v639 = vld [vmem:[#allocation2 + $0x140] sm:$0xff]
      %v640 = vld [vmem:[#allocation2 + $0x148] sm:$0xff]
      %v641 = vld [vmem:[#allocation2 + $0x150] sm:$0xff]
      %v642 = vld [vmem:[#allocation2 + $0x158] sm:$0xff]
      %v643 = vld [vmem:[#allocation2 + $0x160] sm:$0xff]
      %v644 = vld [vmem:[#allocation2 + $0x168] sm:$0xff]
      %v645 = vld [vmem:[#allocation2 + $0x170] sm:$0xff]
      %v646 = vld [vmem:[#allocation2 + $0x178] sm:$0xff]
      %v647 = vld [vmem:[#allocation2 + $0x180] sm:$0xff]
      %v648 = vld [vmem:[#allocation2 + $0x188] sm:$0xff]
      %v649 = vld [vmem:[#allocation2 + $0x190] sm:$0xff]
      %v650 = vld [vmem:[#allocation2 + $0x198] sm:$0xff]
      %v651 = vld [vmem:[#allocation2 + $0x1a0] sm:$0xff]
      %v652 = vld [vmem:[#allocation2 + $0x1a8] sm:$0xff]
      %v653 = vld [vmem:[#allocation2 + $0x1b0] sm:$0xff]
      %v654 = vld [vmem:[#allocation2 + $0x1b8] sm:$0xff]
      %v655 = vld [vmem:[#allocation2 + $0x1c0] sm:$0xff]
      %v656 = vld [vmem:[#allocation2 + $0x1c8] sm:$0xff]
      %v657 = vld [vmem:[#allocation2 + $0x1d0] sm:$0xff]
      %v658 = vld [vmem:[#allocation2 + $0x1d8] sm:$0xff]
      %v659 = vld [vmem:[#allocation2 + $0x1e0] sm:$0xff]
      %v660 = vld [vmem:[#allocation2 + $0x1e8] sm:$0xff]
      %v661 = vld [vmem:[#allocation2 + $0x1f0] sm:$0xff]
      %v662 = vld [vmem:[#allocation2 + $0x1f8] sm:$0xff]
      %v663 = vld [vmem:[%s2] sm:$0x1]
      %v665 = vperm.slane %v663, 0
      %v667 = vadd.f32 %v599, %v665
      %v668 = vadd.f32 %v600, %v665
      %v669 = vadd.f32 %v601, %v665
      %v670 = vadd.f32 %v602, %v665
      %v671 = vadd.f32 %v603, %v665
      %v672 = vadd.f32 %v604, %v665
      %v673 = vadd.f32 %v605, %v665
      %v674 = vadd.f32 %v606, %v665
      %v675 = vadd.f32 %v607, %v665
      %v676 = vadd.f32 %v608, %v665
      %v677 = vadd.f32 %v609, %v665
      %v678 = vadd.f32 %v610, %v665
      %v679 = vadd.f32 %v611, %v665
      %v680 = vadd.f32 %v612, %v665
      %v681 = vadd.f32 %v613, %v665
      %v682 = vadd.f32 %v614, %v665
      %v683 = vadd.f32 %v615, %v665
      %v684 = vadd.f32 %v616, %v665
      %v685 = vadd.f32 %v617, %v665
      %v686 = vadd.f32 %v618, %v665
      %v687 = vadd.f32 %v619, %v665
      %v688 = vadd.f32 %v620, %v665
      %v689 = vadd.f32 %v621, %v665
      %v690 = vadd.f32 %v622, %v665
      %v691 = vadd.f32 %v623, %v665
      %v692 = vadd.f32 %v624, %v665
      %v693 = vadd.f32 %v625, %v665
      %v694 = vadd.f32 %v626, %v665
      %v695 = vadd.f32 %v627, %v665
      %v696 = vadd.f32 %v628, %v665
      %v697 = vadd.f32 %v629, %v665
      %v698 = vadd.f32 %v630, %v665
      %v699 = vadd.f32 %v631, %v665
      %v700 = vadd.f32 %v632, %v665
      %v701 = vadd.f32 %v633, %v665
      %v702 = vadd.f32 %v634, %v665
      %v703 = vadd.f32 %v635, %v665
      %v704 = vadd.f32 %v636, %v665
      %v705 = vadd.f32 %v637, %v665
      %v706 = vadd.f32 %v638, %v665
      %v707 = vadd.f32 %v639, %v665
      %v708 = vadd.f32 %v640, %v665
      %v709 = vadd.f32 %v641, %v665
      %v710 = vadd.f32 %v642, %v665
      %v711 = vadd.f32 %v643, %v665
      %v712 = vadd.f32 %v644, %v665
      %v713 = vadd.f32 %v645, %v665
      %v714 = vadd.f32 %v646, %v665
      %v715 = vadd.f32 %v647, %v665
      %v716 = vadd.f32 %v648, %v665
      %v717 = vadd.f32 %v649, %v665
      %v718 = vadd.f32 %v650, %v665
      %v719 = vadd.f32 %v651, %v665
      %v720 = vadd.f32 %v652, %v665
      %v721 = vadd.f32 %v653, %v665
      %v722 = vadd.f32 %v654, %v665
      %v723 = vadd.f32 %v655, %v665
      %v724 = vadd.f32 %v656, %v665
      %v725 = vadd.f32 %v657, %v665
      %v726 = vadd.f32 %v658, %v665
      %v727 = vadd.f32 %v659, %v665
      %v728 = vadd.f32 %v660, %v665
      %v729 = vadd.f32 %v661, %v665
      %v730 = vadd.f32 %v662, %v665
      %v731 = vpack.c.bf16 %v667, %v667
      %v732 = vpack.c.bf16 %v668, %v668
      %v733 = vpack.c.bf16 %v669, %v669
      %v734 = vpack.c.bf16 %v670, %v670
      %v735 = vpack.c.bf16 %v671, %v671
      %v736 = vpack.c.bf16 %v672, %v672
      %v737 = vpack.c.bf16 %v673, %v673
      %v738 = vpack.c.bf16 %v674, %v674
      %v739 = vpack.c.bf16 %v675, %v675
      %v740 = vpack.c.bf16 %v676, %v676
      %v741 = vpack.c.bf16 %v677, %v677
      %v742 = vpack.c.bf16 %v678, %v678
      %v743 = vpack.c.bf16 %v679, %v679
      %v744 = vpack.c.bf16 %v680, %v680
      %v745 = vpack.c.bf16 %v681, %v681
      %v746 = vpack.c.bf16 %v682, %v682
      %v747 = vpack.c.bf16 %v683, %v683
      %v748 = vpack.c.bf16 %v684, %v684
      %v749 = vpack.c.bf16 %v685, %v685
      %v750 = vpack.c.bf16 %v686, %v686
      %v751 = vpack.c.bf16 %v687, %v687
      %v752 = vpack.c.bf16 %v688, %v688
      %v753 = vpack.c.bf16 %v689, %v689
      %v754 = vpack.c.bf16 %v690, %v690
      %v755 = vpack.c.bf16 %v691, %v691
      %v756 = vpack.c.bf16 %v692, %v692
      %v757 = vpack.c.bf16 %v693, %v693
      %v758 = vpack.c.bf16 %v694, %v694
      %v759 = vpack.c.bf16 %v695, %v695
      %v760 = vpack.c.bf16 %v696, %v696
      %v761 = vpack.c.bf16 %v697, %v697
      %v762 = vpack.c.bf16 %v698, %v698
      %v763 = vpack.c.bf16 %v699, %v699
      %v764 = vpack.c.bf16 %v700, %v700
      %v765 = vpack.c.bf16 %v701, %v701
      %v766 = vpack.c.bf16 %v702, %v702
      %v767 = vpack.c.bf16 %v703, %v703
      %v768 = vpack.c.bf16 %v704, %v704
      %v769 = vpack.c.bf16 %v705, %v705
      %v770 = vpack.c.bf16 %v706, %v706
      %v771 = vpack.c.bf16 %v707, %v707
      %v772 = vpack.c.bf16 %v708, %v708
      %v773 = vpack.c.bf16 %v709, %v709
      %v774 = vpack.c.bf16 %v710, %v710
      %v775 = vpack.c.bf16 %v711, %v711
      %v776 = vpack.c.bf16 %v712, %v712
      %v777 = vpack.c.bf16 %v713, %v713
      %v778 = vpack.c.bf16 %v714, %v714
      %v779 = vpack.c.bf16 %v715, %v715
      %v780 = vpack.c.bf16 %v716, %v716
      %v781 = vpack.c.bf16 %v717, %v717
      %v782 = vpack.c.bf16 %v718, %v718
      %v783 = vpack.c.bf16 %v719, %v719
      %v784 = vpack.c.bf16 %v720, %v720
      %v785 = vpack.c.bf16 %v721, %v721
      %v786 = vpack.c.bf16 %v722, %v722
      %v787 = vpack.c.bf16 %v723, %v723
      %v788 = vpack.c.bf16 %v724, %v724
      %v789 = vpack.c.bf16 %v725, %v725
      %v790 = vpack.c.bf16 %v726, %v726
      %v791 = vpack.c.bf16 %v727, %v727
      %v792 = vpack.c.bf16 %v728, %v728
      %v793 = vpack.c.bf16 %v729, %v729
      %v794 = vpack.c.bf16 %v730, %v730
      %795 = vst [vmem:[#allocation8] sm:$0xf] %v731
      %796 = vst [vmem:[#allocation8 + $0x4] sm:$0xf] %v732
      %797 = vst [vmem:[#allocation8 + $0x8] sm:$0xf] %v733
      %798 = vst [vmem:[#allocation8 + $0xc] sm:$0xf] %v734
      %799 = vst [vmem:[#allocation8 + $0x10] sm:$0xf] %v735
      %800 = vst [vmem:[#allocation8 + $0x14] sm:$0xf] %v736
      %801 = vst [vmem:[#allocation8 + $0x18] sm:$0xf] %v737
      %802 = vst [vmem:[#allocation8 + $0x1c] sm:$0xf] %v738
      %803 = vst [vmem:[#allocation8 + $0x20] sm:$0xf] %v739
      %804 = vst [vmem:[#allocation8 + $0x24] sm:$0xf] %v740
      %805 = vst [vmem:[#allocation8 + $0x28] sm:$0xf] %v741
      %806 = vst [vmem:[#allocation8 + $0x2c] sm:$0xf] %v742
      %807 = vst [vmem:[#allocation8 + $0x30] sm:$0xf] %v743
      %808 = vst [vmem:[#allocation8 + $0x34] sm:$0xf] %v744
      %809 = vst [vmem:[#allocation8 + $0x38] sm:$0xf] %v745
      %810 = vst [vmem:[#allocation8 + $0x3c] sm:$0xf] %v746
      %811 = vst [vmem:[#allocation8 + $0x40] sm:$0xf] %v747
      %812 = vst [vmem:[#allocation8 + $0x44] sm:$0xf] %v748
      %813 = vst [vmem:[#allocation8 + $0x48] sm:$0xf] %v749
      %814 = vst [vmem:[#allocation8 + $0x4c] sm:$0xf] %v750
      %815 = vst [vmem:[#allocation8 + $0x50] sm:$0xf] %v751
      %816 = vst [vmem:[#allocation8 + $0x54] sm:$0xf] %v752
      %817 = vst [vmem:[#allocation8 + $0x58] sm:$0xf] %v753
      %818 = vst [vmem:[#allocation8 + $0x5c] sm:$0xf] %v754
      %819 = vst [vmem:[#allocation8 + $0x60] sm:$0xf] %v755
      %820 = vst [vmem:[#allocation8 + $0x64] sm:$0xf] %v756
      %821 = vst [vmem:[#allocation8 + $0x68] sm:$0xf] %v757
      %822 = vst [vmem:[#allocation8 + $0x6c] sm:$0xf] %v758
      %823 = vst [vmem:[#allocation8 + $0x70] sm:$0xf] %v759
      %824 = vst [vmem:[#allocation8 + $0x74] sm:$0xf] %v760
      %825 = vst [vmem:[#allocation8 + $0x78] sm:$0xf] %v761
      %826 = vst [vmem:[#allocation8 + $0x7c] sm:$0xf] %v762
      %827 = vst [vmem:[#allocation8 + $0x80] sm:$0xf] %v763
      %828 = vst [vmem:[#allocation8 + $0x84] sm:$0xf] %v764
      %829 = vst [vmem:[#allocation8 + $0x88] sm:$0xf] %v765
      %830 = vst [vmem:[#allocation8 + $0x8c] sm:$0xf] %v766
      %831 = vst [vmem:[#allocation8 + $0x90] sm:$0xf] %v767
      %832 = vst [vmem:[#allocation8 + $0x94] sm:$0xf] %v768
      %833 = vst [vmem:[#allocation8 + $0x98] sm:$0xf] %v769
      %834 = vst [vmem:[#allocation8 + $0x9c] sm:$0xf] %v770
      %835 = vst [vmem:[#allocation8 + $0xa0] sm:$0xf] %v771
      %836 = vst [vmem:[#allocation8 + $0xa4] sm:$0xf] %v772
      %837 = vst [vmem:[#allocation8 + $0xa8] sm:$0xf] %v773
      %838 = vst [vmem:[#allocation8 + $0xac] sm:$0xf] %v774
      %839 = vst [vmem:[#allocation8 + $0xb0] sm:$0xf] %v775
      %840 = vst [vmem:[#allocation8 + $0xb4] sm:$0xf] %v776
      %841 = vst [vmem:[#allocation8 + $0xb8] sm:$0xf] %v777
      %842 = vst [vmem:[#allocation8 + $0xbc] sm:$0xf] %v778
      %843 = vst [vmem:[#allocation8 + $0xc0] sm:$0xf] %v779
      %844 = vst [vmem:[#allocation8 + $0xc4] sm:$0xf] %v780
      %845 = vst [vmem:[#allocation8 + $0xc8] sm:$0xf] %v781
      %846 = vst [vmem:[#allocation8 + $0xcc] sm:$0xf] %v782
      %847 = vst [vmem:[#allocation8 + $0xd0] sm:$0xf] %v783
      %848 = vst [vmem:[#allocation8 + $0xd4] sm:$0xf] %v784
      %849 = vst [vmem:[#allocation8 + $0xd8] sm:$0xf] %v785
      %850 = vst [vmem:[#allocation8 + $0xdc] sm:$0xf] %v786
      %851 = vst [vmem:[#allocation8 + $0xe0] sm:$0xf] %v787
      %852 = vst [vmem:[#allocation8 + $0xe4] sm:$0xf] %v788
      %853 = vst [vmem:[#allocation8 + $0xe8] sm:$0xf] %v789
      %854 = vst [vmem:[#allocation8 + $0xec] sm:$0xf] %v790
      %855 = vst [vmem:[#allocation8 + $0xf0] sm:$0xf] %v791
      %856 = vst [vmem:[#allocation8 + $0xf4] sm:$0xf] %v792
      %857 = vst [vmem:[#allocation8 + $0xf8] sm:$0xf] %v793
      %858 = vst [vmem:[#allocation8 + $0xfc] sm:$0xf] %v794
    $region29: #{tpu_custom_call.1} parent=1 // pred_fallthru
      _
    // Predicated region
    $region30: #{tpu_custom_call.1} parent=1 // pred_check
      _
    $region31: #{tpu_custom_call.1} parent=1 // pred_check_branch
      %860 = sbr.rel (0) target = $region33
    $region32: #{tpu_custom_call.1} parent=1 // pred_region
      %862 = vsyncadd [#allocation5], 0
      %s863 = sshll.u32 [#allocation8], 4
      %s864 = int_to_ptr.vmem [resolvable:$true] %s863
      %s865 = sshll.u32 %s3, 4
      %s866 = int_to_ptr.hbm [resolvable:$true] %s865
      %871 = dma.vmem_to_hbm [thread:$0]  %s864, 4096, %s866, [#allocation5], 64, 64, 4
    $region33: #{tpu_custom_call.1} parent=1 // pred_fallthru
      _
    // Predicated region
    $region34: #{tpu_custom_call.1} parent=1 // pred_check
      _
    $region35: #{tpu_custom_call.1} parent=1 // pred_check_branch
      %873 = sbr.rel (0) target = $region37
    $region36: #{tpu_custom_call.1} parent=1 // pred_region
      %875 = dma.done [#allocation5], 4096
    $region37: #{tpu_custom_call.1} parent=1 // pred_fallthru
      _
    %876 = vsyncpa [#allocation4], 1
    %877 = vsyncpa [#allocation7], 1
    %878 = vsyncpa [#allocation5], 1

</llo_original>
